<compile_context>
chip_gen: v7x
topology: tpu7x:2x2x1
jax: 0.10.0
libtpu: 0.0.40
codegen_flags: <defaults>
</compile_context>

<pallas_src>
import functools

import jax
import jax.numpy as jnp
from jax.experimental import pallas as pl
from jax.experimental.pallas import tpu as pltpu


def _sampled_softmax_loss_kernel(table_ref, hid_ref, idx_ref, out_ref, *, context_size):
    """Per batch-block partial of the sampled-softmax loss.

    table_ref : (D, V)      f32  — embedding table, transposed, VMEM-resident
    hid_ref   : (Bt, D)     f32  — hidden vectors for this batch block
    idx_ref   : (Bt, K, 1)  i32  — concat[positives (C), negatives (C*N)] indices
    out_ref   : (Bt, 128)   f32  — per-row partial, broadcast across lanes
    """
    table_t = table_ref[...]                       # (D, V)
    hid = hid_ref[...]                             # (Bt, D)
    idx = idx_ref[...]                             # (Bt, K, 1) int32

    bt, k = idx.shape[0], idx.shape[1]
    v = table_t.shape[1]

    # Full-vocab scores on the MXU: scores[b, v] = <h_b, e_v>.
    scores = jnp.dot(hid, table_t, preferred_element_type=jnp.float32)      # (Bt, V)

    # In-kernel selection ("gather") of the sampled logits via one-hot masking:
    # no gathered embedding copies ever touch HBM.
    vocab_iota = jax.lax.broadcasted_iota(jnp.int32, (bt, k, v), 2)
    onehot = (idx == vocab_iota).astype(jnp.float32)                        # (Bt, K, V)
    logits = jnp.sum(onehot * scores[:, None, :], axis=-1)                  # (Bt, K)

    # First C columns are positives (+logit); the rest are negatives (.neg() folded).
    k_iota = jax.lax.broadcasted_iota(jnp.int32, (bt, k), 1)
    signed = jnp.where(k_iota < context_size, logits, -logits)              # (Bt, K)

    # Stable log-sigmoid: log σ(x) = min(x, 0) - log(1 + exp(-|x|)).
    log_sig = jnp.minimum(signed, 0.0) - jnp.log(1.0 + jnp.exp(-jnp.abs(signed)))

    # Per-row partial: (1/C) * Σ_k log σ — covers both the positive mean-over-C and
    # the negative sum-over-N-then-mean-over-C of the reference.
    partial = jnp.sum(log_sig, axis=-1, keepdims=True) / jnp.float32(context_size)

    out_ref[...] = jnp.broadcast_to(partial, out_ref.shape)                 # lane-dense store


def sampled_softmax_loss(emb_table, hidden, positives, negatives, *, block_b=8):
    """JAX wrapper: index packing + Pallas kernel; final mean done on the host side."""
    if positives.ndim == 1:
        positives = positives[:, None]

    b, c = positives.shape
    v, d = emb_table.shape

    # One index slab: [positives | negatives]  -> (B, K) with K = C*(1+N).
    idx = jnp.concatenate([positives, negatives], axis=1).astype(jnp.int32)
    k = idx.shape[1]

    # Pad batch up to a multiple of the batch tile (padded rows are sliced off below).
    b_pad = pl.cdiv(b, block_b) * block_b
    pad = b_pad - b
    hidden = hidden.astype(jnp.float32)
    if pad:
        idx = jnp.pad(idx, ((0, pad), (0, 0)))
        hidden = jnp.pad(hidden, ((0, pad), (0, 0)))

    idx3 = idx[:, :, None]                                   # (B_pad, K, 1), kernel-friendly
    table_t = emb_table.T.astype(jnp.float32)                # (D, V) — tiny one-time copy

    grid = (b_pad // block_b,)

    out = pl.pallas_call(
        functools.partial(_sampled_softmax_loss_kernel, context_size=c),
        out_shape=jax.ShapeDtypeStruct((b_pad, 128), jnp.float32),
        grid_spec=pltpu.PrefetchScalarGridSpec(
            num_scalar_prefetch=0,
            grid=grid,
            in_specs=[
                # Table: same block every step -> stays resident in VMEM (DMA'd once).
                pl.BlockSpec((d, v), lambda i: (0, 0)),
                pl.BlockSpec((block_b, d), lambda i: (i, 0)),
                pl.BlockSpec((block_b, k, 1), lambda i: (i, 0, 0)),
            ],
            out_specs=pl.BlockSpec((block_b, 128), lambda i: (i, 0)),
        ),
        compiler_params=pltpu.CompilerParams(
            dimension_semantics=("parallel",),        # independent per-block partials (megacore on v7x)
            vmem_limit_bytes=32 * 1024 * 1024,
        ),
    )(table_t, hidden, idx3)

    # loss = -mean_b( p_loss + n_loss ); padded rows sliced off, lane 0 holds the partial.
    return -jnp.mean(out[:b, 0])


def _reference_loss(emb_table, hidden, positives, negatives, num_negatives):
    """Pure-JAX reference mirroring the PyTorch forward exactly (sigmoid-then-log)."""
    b, c = positives.shape
    pos_emb = emb_table[positives]                     # (B, C, D)
    neg_emb = -emb_table[negatives]                    # (B, C*N, D)   .neg()
    p_logits = jnp.einsum("bcd,bd->bc", pos_emb, hidden)
    n_logits = jnp.einsum("bkd,bd->bk", neg_emb, hidden)
    p_loss = jnp.mean(jnp.log(jax.nn.sigmoid(p_logits)), axis=1)
    n_loss = jnp.mean(
        jnp.sum(jnp.log(jax.nn.sigmoid(n_logits)).reshape(b, c, num_negatives), axis=2),
        axis=1,
    )
    return -jnp.mean(p_loss + n_loss)


if __name__ == "__main__":
    # Small shapes consistent with the module's forward (batch bumped to 16 so the
    # batched grid actually has >1 step).
    vocab_size = 100
    emb_dims = 32
    num_negatives = 5
    batch_size = 16
    context_size = 3

    key = jax.random.PRNGKey(0)
    k_emb, k_hid, k_pos, k_neg = jax.random.split(key, 4)

    # nn.Embedding(vocab_size, emb_dims) with uniform(-0.5/D, 0.5/D) init.
    init_range = 0.5 / emb_dims
    emb_table = jax.random.uniform(
        k_emb, (vocab_size, emb_dims), jnp.float32, -init_range, init_range
    )

    hidden = jax.random.normal(k_hid, (batch_size, emb_dims), jnp.float32)
    positives = jax.random.randint(k_pos, (batch_size, context_size), 0, vocab_size)
    # TODO(synk): torch samples negatives in-forward with uniform_(1, vocab-1).long()
    # (padding=True) or torch.multinomial(weights) — RNG glue replicated here with
    # jax.random.randint in [1, vocab-2]; the weighted-multinomial branch is not ported.
    negatives = jax.random.randint(
        k_neg, (batch_size, context_size * num_negatives), 1, vocab_size - 1
    )

    loss = sampled_softmax_loss(emb_table, hidden, positives, negatives)
    loss = jax.block_until_ready(loss)

    ref = _reference_loss(emb_table, hidden, positives, negatives, num_negatives)
    assert jnp.abs(loss - ref) < 1e-5, (loss, ref)

    print("KERNEL_OK")
</pallas_src>

<mosaic_0001>
module attributes {stable_mosaic.version = 11 : i64} {
  func.func @_sampled_softmax_loss_kernel(%arg0: i32, %arg1: memref<32x100xf32, #tpu.memory_space<vmem>>, %arg2: memref<8x32xf32, #tpu.memory_space<vmem>>, %arg3: memref<8x18x1xi32, #tpu.memory_space<vmem>>, %arg4: memref<8x128xf32, #tpu.memory_space<vmem>>) attributes {dimension_semantics = [#tpu.dimension_semantics<parallel>], iteration_bounds = array<i64: 2>, scalar_prefetch = 0 : i64, scratch_operands = 0 : i64, tpu.core_type = #tpu.core_type<tc>, window_params = [{pipeline_mode = #tpu.pipeline_mode<synchronous>, transform_indices = @transform_0, window_bounds = array<i64: 32, 100>}, {transform_indices = @transform_1, window_bounds = array<i64: 8, 32>}, {transform_indices = @transform_2, window_bounds = array<i64: 8, 18, 1>}, {transform_indices = @transform_3, window_bounds = array<i64: 8, 128>}]} {
    %c0 = arith.constant 0 : index
    %c0_0 = arith.constant 0 : index
    %0 = vector.load %arg1[%c0, %c0_0] : memref<32x100xf32, #tpu.memory_space<vmem>>, vector<32x100xf32>
    %c0_1 = arith.constant 0 : index
    %c0_2 = arith.constant 0 : index
    %1 = vector.load %arg2[%c0_1, %c0_2] : memref<8x32xf32, #tpu.memory_space<vmem>>, vector<8x32xf32>
    %c0_3 = arith.constant 0 : index
    %c0_4 = arith.constant 0 : index
    %c0_5 = arith.constant 0 : index
    %2 = vector.load %arg3[%c0_3, %c0_4, %c0_5] : memref<8x18x1xi32, #tpu.memory_space<vmem>>, vector<8x18x1xi32>
    %cst = arith.constant dense<0.000000e+00> : vector<8x100xf32>
    %3 = tpu.matmul %1, %0, %cst {dimension_numbers = #tpu.dot_dimension_numbers<[1], [0], [0], [1], [0, 0, 1, 1], [], []>} : vector<8x32xf32>, vector<32x100xf32>, vector<8x100xf32> -> vector<8x100xf32>
    %4 = tpu.iota {dimensions = array<i32: 2>} : vector<8x18x100xi32>
    %5 = vector.broadcast %2 : vector<8x18x1xi32> to vector<8x18x100xi32>
    %6 = arith.cmpi eq, %5, %4 : vector<8x18x100xi32>
    %7 = arith.extui %6 : vector<8x18x100xi1> to vector<8x18x100xi32>
    %8 = arith.sitofp %7 : vector<8x18x100xi32> to vector<8x18x100xf32>
    %9 = vector.shape_cast %3 : vector<8x100xf32> to vector<8x1x100xf32>
    %10 = vector.broadcast %9 : vector<8x1x100xf32> to vector<8x18x100xf32>
    %11 = arith.mulf %8, %10 : vector<8x18x100xf32>
    %cst_6 = arith.constant dense<0.000000e+00> : vector<8x18xf32>
    %12 = vector.multi_reduction <add>, %11, %cst_6 [2] : vector<8x18x100xf32> to vector<8x18xf32>
    %13 = tpu.iota {dimensions = array<i32: 1>} : vector<8x18xi32>
    %c3_i32 = arith.constant 3 : i32
    %14 = vector.broadcast %c3_i32 : i32 to vector<8x18xi32>
    %15 = arith.cmpi slt, %13, %14 : vector<8x18xi32>
    %cst_7 = arith.constant 0.000000e+00 : f32
    %16 = vector.broadcast %cst_7 : f32 to vector<8x18xf32>
    %17 = arith.subf %16, %12 : vector<8x18xf32>
    %18 = arith.select %15, %12, %17 : vector<8x18xi1>, vector<8x18xf32>
    %cst_8 = arith.constant 0.000000e+00 : f32
    %19 = vector.broadcast %cst_8 : f32 to vector<8x18xf32>
    %20 = arith.minimumf %18, %19 : vector<8x18xf32>
    %21 = math.absf %18 : vector<8x18xf32>
    %cst_9 = arith.constant 0.000000e+00 : f32
    %22 = vector.broadcast %cst_9 : f32 to vector<8x18xf32>
    %23 = arith.subf %22, %21 : vector<8x18xf32>
    %24 = math.exp %23 : vector<8x18xf32>
    %cst_10 = arith.constant 1.000000e+00 : f32
    %25 = vector.broadcast %cst_10 : f32 to vector<8x18xf32>
    %26 = arith.addf %25, %24 : vector<8x18xf32>
    %27 = math.log %26 : vector<8x18xf32>
    %28 = arith.subf %20, %27 : vector<8x18xf32>
    %cst_11 = arith.constant dense<0.000000e+00> : vector<8xf32>
    %29 = vector.multi_reduction <add>, %28, %cst_11 [1] : vector<8x18xf32> to vector<8xf32>
    %30 = vector.shape_cast %29 : vector<8xf32> to vector<8x1xf32>
    %cst_12 = arith.constant 3.000000e+00 : f32
    %31 = vector.broadcast %cst_12 : f32 to vector<8x1xf32>
    %32 = arith.divf %30, %31 : vector<8x1xf32>
    %33 = vector.shape_cast %32 : vector<8x1xf32> to vector<8x1xf32>
    %34 = vector.broadcast %33 : vector<8x1xf32> to vector<8x128xf32>
    %c0_13 = arith.constant 0 : index
    %c0_14 = arith.constant 0 : index
    %35 = vector.load %arg4[%c0_13, %c0_14] : memref<8x128xf32, #tpu.memory_space<vmem>>, vector<8x128xf32>
    tpu.vector_store %arg4[%c0_13, %c0_14], %34 {strides = array<i32>} : memref<8x128xf32, #tpu.memory_space<vmem>>, vector<8x128xf32>,
    return
  }
  func.func @transform_0(%arg0: i32) -> (i32, i32) {
    %c0_i32 = arith.constant 0 : i32
    %c0_i32_0 = arith.constant 0 : i32
    %c0_i32_1 = arith.constant 0 : i32
    return %c0_i32, %c0_i32_0 : i32, i32
  }
  func.func @transform_1(%arg0: i32) -> (i32, i32) {
    %c0_i32 = arith.constant 0 : i32
    %c0_i32_0 = arith.constant 0 : i32
    return %arg0, %c0_i32 : i32, i32
  }
  func.func @transform_2(%arg0: i32) -> (i32, i32, i32) {
    %c0_i32 = arith.constant 0 : i32
    %c0_i32_0 = arith.constant 0 : i32
    %c0_i32_1 = arith.constant 0 : i32
    return %arg0, %c0_i32, %c0_i32_0 : i32, i32, i32
  }
  func.func @transform_3(%arg0: i32) -> (i32, i32) {
    %c0_i32 = arith.constant 0 : i32
    %c0_i32_0 = arith.constant 0 : i32
    return %arg0, %c0_i32 : i32, i32
  }
}

</mosaic_0001>

<llo_original>
// kernel: tpu_custom_call.1
$region0: #{tpu_custom_call.1}
  #allocation0 [shape = 'u32[]', space=smem, size = 0x4, offset = 0x4, fixed_abs, tag = 'smem constant byte address 0x4 - core index']
  #allocation1 [shape = 'u32[144,128]{1,0:T(1,128)}', space=vmem, size = 0x12000, scoped, tag = 'internal scratch']
  %s0 = inlined_call_operand.vmem [shape: f32[32,100], index: 0, kind: input, shape index: {}]
  %s1 = inlined_call_operand.vmem [shape: f32[16,32], index: 1, kind: input, shape index: {}]
  %s2 = inlined_call_operand.vmem [shape: s32[16,18,1], index: 2, kind: input, shape index: {}]
  %s3 = inlined_call_operand.hbm [shape: f32[16,128], index: 3, kind: output, shape index: {}]
  %s4 = sld [smem:[#allocation0]]
  $region45: #{tpu_custom_call.1} parent=0
    _
  %s6 = ssub.s32 1, %s4
  %s7 = scalar_select 0, %s6, %s4
  $region1: #{tpu_custom_call.1} parent=0
    #allocation2 [shape = 'u8[8192]{0}', space=vmem, size = 0x2000, scoped, tag = 'output window, operand 0']
    #allocation3 [shape = 's32[2]{0}', space=sflag, size = 0x8, scoped, tag = 'scoped memory for tpu_custom_call.1']
    %8 = vsyncpa [#allocation3], 0
    %s9 = scalar_lea.sflag [#allocation3], 1
    %10 = vsyncpa %s9, 0
    loop: start=0, step=1, limit=4
    $region2: #{tpu_custom_call.1} parent=1 // loop_pre_header
      _
    $region3: #{tpu_custom_call.1} parent=1 // loop_header
      %s12 = sphi 0, %s16
      %p13 = scmp.ge.s32.totalorder %s12, 4
      %s20 = sphi 0, %s20
      %s22 = sphi 0, %s20
      %s23 = sphi 0, %s22
      %s37 = sphi 0, %s23
      %s43 = sphi 0, %s45
      %s46 = sphi 0, %s43
      %s47 = sphi 0, %s46
      %s63 = sphi 0, %s47
      %s69 = sphi 0, %s71
      %s72 = sphi 0, %s69
      %s73 = sphi 0, %s72
      %s89 = sphi 0, %s73
      %s95 = sphi 0, %s97
      %s98 = sphi 0, %s95
      %s99 = sphi 0, %s98
      %s115 = sphi 0, %s99
    $region4: #{tpu_custom_call.1} parent=1 // loop_header_branch
      %15 = sbr.rel (%p13) target = $region8
    $region5: #{tpu_custom_call.1} parent=1 // loop_body
      %s17 = ssub.s32 %s12, 1
      %s18 = ssub.s32 %s12, 2
      %s19 = sadd.s32 %s12, 1
      %s21 = sadd.s32 %s20, 1
      %p24 = scmp.eq.s32.totalorder %s12, 1
      %p25 = scmp.ne.s32.totalorder %s20, %s22
      %p26 = scmp.eq.s32.totalorder %s12, 0
      %p27 = por %p25, %p26
      %p28 = scmp.ne.s32.totalorder %s20, %s22
      %p29 = scmp.eq.s32.totalorder %s17, 1
      %p30 = por %p28, %p29
      %p31 = scmp.ne.s32.totalorder %s22, %s23
      %p32 = scmp.eq.s32.totalorder %s17, 0
      %p33 = por %p31, %p32
      %p34 = scmp.ne.s32.totalorder %s22, %s23
      %p35 = scmp.eq.s32.totalorder %s18, 1
      %p36 = por %p34, %p35
      %p38 = scmp.ne.s32.totalorder %s23, %s37
      %p39 = scmp.eq.s32.totalorder %s18, 0
      %p40 = por %p38, %p39
      %s41 = ssub.s32 %s12, %s19
      %p42 = scmp.eq.s32.totalorder %s41, 0
      %s44 = sadd.s32 %s43, 1
      %s45 = scalar_select %p42, %s43, %s44
      %p48 = pneg %p42
      %p49 = scmp.eq.s32.totalorder %s12, 1
      %p50 = por %p48, %p49
      %p51 = scmp.ne.s32.totalorder %s43, %s46
      %p52 = scmp.eq.s32.totalorder %s12, 0
      %p53 = por %p51, %p52
      %p54 = scmp.ne.s32.totalorder %s43, %s46
      %p55 = scmp.eq.s32.totalorder %s17, 1
      %p56 = por %p54, %p55
      %p57 = scmp.ne.s32.totalorder %s46, %s47
      %p58 = scmp.eq.s32.totalorder %s17, 0
      %p59 = por %p57, %p58
      %p60 = scmp.ne.s32.totalorder %s46, %s47
      %p61 = scmp.eq.s32.totalorder %s18, 1
      %p62 = por %p60, %p61
      %p64 = scmp.ne.s32.totalorder %s47, %s63
      %p65 = scmp.eq.s32.totalorder %s18, 0
      %p66 = por %p64, %p65
      %s67 = ssub.s32 %s12, %s19
      %p68 = scmp.eq.s32.totalorder %s67, 0
      %s70 = sadd.s32 %s69, 1
      %s71 = scalar_select %p68, %s69, %s70
      %p74 = pneg %p68
      %p75 = scmp.eq.s32.totalorder %s12, 1
      %p76 = por %p74, %p75
      %p77 = scmp.ne.s32.totalorder %s69, %s72
      %p78 = scmp.eq.s32.totalorder %s12, 0
      %p79 = por %p77, %p78
      %p80 = scmp.ne.s32.totalorder %s69, %s72
      %p81 = scmp.eq.s32.totalorder %s17, 1
      %p82 = por %p80, %p81
      %p83 = scmp.ne.s32.totalorder %s72, %s73
      %p84 = scmp.eq.s32.totalorder %s17, 0
      %p85 = por %p83, %p84
      %p86 = scmp.ne.s32.totalorder %s72, %s73
      %p87 = scmp.eq.s32.totalorder %s18, 1
      %p88 = por %p86, %p87
      %p90 = scmp.ne.s32.totalorder %s73, %s89
      %p91 = scmp.eq.s32.totalorder %s18, 0
      %p92 = por %p90, %p91
      %s93 = ssub.s32 %s12, %s19
      %p94 = scmp.eq.s32.totalorder %s93, 0
      %s96 = sadd.s32 %s95, 1
      %s97 = scalar_select %p94, %s95, %s96
      %p100 = pneg %p94
      %p101 = scmp.eq.s32.totalorder %s12, 1
      %p102 = por %p100, %p101
      %p103 = scmp.ne.s32.totalorder %s95, %s98
      %p104 = scmp.eq.s32.totalorder %s12, 0
      %p105 = por %p103, %p104
      %p106 = scmp.ne.s32.totalorder %s95, %s98
      %p107 = scmp.eq.s32.totalorder %s17, 1
      %p108 = por %p106, %p107
      %p109 = scmp.ne.s32.totalorder %s98, %s99
      %p110 = scmp.eq.s32.totalorder %s17, 0
      %p111 = por %p109, %p110
      %p112 = scmp.ne.s32.totalorder %s98, %s99
      %p113 = scmp.eq.s32.totalorder %s18, 1
      %p114 = por %p112, %p113
      %p116 = scmp.ne.s32.totalorder %s99, %s115
      %p117 = scmp.eq.s32.totalorder %s18, 0
      %p118 = por %p116, %p117
      %p119 = scmp.le.s32.totalorder 1, %s12
      %p120 = scmp.lt.s32.totalorder %s12, 3
      %p121 = pnand %p119, %p120
      %p122 = pneg %p121
      // Predicated region
      $region9: #{tpu_custom_call.1} parent=5 // pred_check
        _
      $region10: #{tpu_custom_call.1} parent=5 // pred_check_branch
        %124 = sbr.rel (%p121) target = $region12
      $region11: #{tpu_custom_call.1} parent=5 // pred_region
        %s125 = ssub.s32 %s12, 1
        // Predicated region
        $region13: #{tpu_custom_call.1} parent=11 // pred_check
          %p126 = pneg %p33
        $region14: #{tpu_custom_call.1} parent=11 // pred_check_branch
          %128 = sbr.rel (%p126) target = $region16
        $region15: #{tpu_custom_call.1} parent=11 // pred_region
          _
        $region16: #{tpu_custom_call.1} parent=11 // pred_fallthru
          _
      $region12: #{tpu_custom_call.1} parent=5 // pred_fallthru
        _
      %p129 = scmp.lt.s32.totalorder %s12, 2
      // Predicated region
      $region17: #{tpu_custom_call.1} parent=5 // pred_check
        %p130 = pneg %p129
      $region18: #{tpu_custom_call.1} parent=5 // pred_check_branch
        %132 = sbr.rel (%p130) target = $region20
      $region19: #{tpu_custom_call.1} parent=5 // pred_region
        // Predicated region
        $region21: #{tpu_custom_call.1} parent=19 // pred_check
          %p133 = pneg %p53
        $region22: #{tpu_custom_call.1} parent=19 // pred_check_branch
          %135 = sbr.rel (%p133) target = $region24
        $region23: #{tpu_custom_call.1} parent=19 // pred_region
          %p136 = scmp.lt.s32.totalorder %s12, 1
          %s137 = scalar_select %p136, %s12, 1
          %s138 = smul.addr %s137, 8
          %s139 = scalar_lea.vmem %s1, %s138
        $region24: #{tpu_custom_call.1} parent=19 // pred_fallthru
          _
        // Predicated region
        $region25: #{tpu_custom_call.1} parent=19 // pred_check
          %p140 = pneg %p79
        $region26: #{tpu_custom_call.1} parent=19 // pred_check_branch
          %142 = sbr.rel (%p140) target = $region28
        $region27: #{tpu_custom_call.1} parent=19 // pred_region
          %s143 = smul.u32 8, %s12
          %p144 = scmp.lt.s32.totalorder %s143, 15
          %s145 = scalar_select %p144, %s143, 15
          %s146 = smul.addr %s145, 3
          %s147 = smul.addr %s146, 8
          %s148 = scalar_lea.vmem %s2, %s147
          %s149 = smul.u32 8, %s12
        $region28: #{tpu_custom_call.1} parent=19 // pred_fallthru
          _
      $region20: #{tpu_custom_call.1} parent=5 // pred_fallthru
        _
      %p150 = scmp.le.s32.totalorder 1, %s12
      %p151 = scmp.lt.s32.totalorder %s12, 3
      %p152 = pnand %p150, %p151
      %p153 = pneg %p152
      // Predicated region
      $region29: #{tpu_custom_call.1} parent=5 // pred_check
        _
      $region30: #{tpu_custom_call.1} parent=5 // pred_check_branch
        %155 = sbr.rel (%p152) target = $region32
      $region31: #{tpu_custom_call.1} parent=5 // pred_region
        %s156 = ssub.s32 %s12, 1
        %p157 = pneg %p33
        %p158 = pneg %p30
        %p159 = scmp.lt.s32.totalorder %s17, 1
        %s160 = scalar_select %p159, %s17, 1
        %s161 = smul.addr %s160, 8
        %s162 = scalar_lea.vmem %s1, %s161
        %p163 = pneg %p59
        %p164 = pneg %p56
        %s165 = smul.u32 8, %s17
        %p166 = scmp.lt.s32.totalorder %s165, 15
        %s167 = scalar_select %p166, %s165, 15
        %s168 = smul.addr %s167, 3
        %s169 = smul.addr %s168, 8
        %s170 = scalar_lea.vmem %s2, %s169
        %p171 = pneg %p85
        %p172 = pneg %p82
        %p173 = pneg %p111
        %p174 = pneg %p108
        %s175 = sand.u32 %s98, 1
        %s176 = scalar_lea.sflag [#allocation3], %s175
        %s177 = sand.u32 %s98, 1
        %s178 = smul.addr %s177, 8
        %s179 = scalar_lea.vmem [#allocation2], %s178
        %p180 = scmp.lt.s32.totalorder %s17, 1
        %s181 = scalar_select %p180, %s17, 1
        %s182 = smul.addr %s181, 8
        %s183 = scalar_lea.vmem %s1, %s182
        %s184 = smul.u32 8, %s17
        %p185 = scmp.lt.s32.totalorder %s184, 15
        %s186 = scalar_select %p185, %s184, 15
        %s187 = smul.addr %s186, 3
        %s188 = smul.addr %s187, 8
        %s189 = scalar_lea.vmem %s2, %s188
        %s190 = smul.u32 8, %s17
        %v191 = vld [vmem:[%s0] sm:$0xff]
        %v192 = vld [vmem:[%s0 + $0x8] sm:$0xff]
        %v193 = vld [vmem:[%s0 + $0x10] sm:$0xff]
        %v194 = vld [vmem:[%s0 + $0x18] sm:$0xff]
        %v195 = vld [vmem:[%s183] sm:$0xff]
        %v196 = vld [vmem:[%s189] sm:$0xff]
        %v197 = vld [vmem:[%s189 + $0x8] sm:$0xff]
        %v198 = vld [vmem:[%s189 + $0x10] sm:$0x3]
        %v199 = vld [vmem:[%s189 + $0x18] sm:$0xff]
        %v200 = vld [vmem:[%s189 + $0x20] sm:$0xff]
        %v201 = vld [vmem:[%s189 + $0x28] sm:$0x3]
        %v202 = vld [vmem:[%s189 + $0x30] sm:$0xff]
        %v203 = vld [vmem:[%s189 + $0x38] sm:$0xff]
        %v204 = vld [vmem:[%s189 + $0x40] sm:$0x3]
        %v205 = vld [vmem:[%s189 + $0x48] sm:$0xff]
        %v206 = vld [vmem:[%s189 + $0x50] sm:$0xff]
        %v207 = vld [vmem:[%s189 + $0x58] sm:$0x3]
        %v208 = vld [vmem:[%s189 + $0x60] sm:$0xff]
        %v209 = vld [vmem:[%s189 + $0x68] sm:$0xff]
        %v210 = vld [vmem:[%s189 + $0x70] sm:$0x3]
        %v211 = vld [vmem:[%s189 + $0x78] sm:$0xff]
        %v212 = vld [vmem:[%s189 + $0x80] sm:$0xff]
        %v213 = vld [vmem:[%s189 + $0x88] sm:$0x3]
        %v214 = vld [vmem:[%s189 + $0x90] sm:$0xff]
        %v215 = vld [vmem:[%s189 + $0x98] sm:$0xff]
        %v216 = vld [vmem:[%s189 + $0xa0] sm:$0x3]
        %v217 = vld [vmem:[%s189 + $0xa8] sm:$0xff]
        %v218 = vld [vmem:[%s189 + $0xb0] sm:$0xff]
        %v219 = vld [vmem:[%s189 + $0xb8] sm:$0x3]
        %vm220 = vcmask 261120
        %v222 = vsel %vm220, %v195, 0
        %224 = vmatprep.subr.mxu0 0.0
        %225 = vmatpush1.msra.mxu0 %v191
        %226 = vmatprep.subr.mxu0 0.0
        %227 = vmatpush1.msra.mxu0 %v192
        %228 = vmatprep.subr.mxu0 0.0
        %229 = vmatpush1.msra.mxu0 %v193
        %230 = vmatprep.subr.mxu0 0.0
        %231 = vmatpush1.msra.mxu0 %v194
        %232 = vmatprep.subr.mxu0 0.0
        %233 = vmatpush1.msra.mxu0 0.0
        %234 = vmatprep.subr.mxu0 0.0
        %235 = vmatpush1.msra.mxu0 0.0
        %236 = vmatprep.subr.mxu0 0.0
        %237 = vmatpush1.msra.mxu0 0.0
        %238 = vmatprep.subr.mxu0 0.0
        %239 = vmatpush1.msra.mxu0 0.0
        %240 = vmatprep.subr.mxu0 0.0
        %241 = vmatpush1.msra.mxu0 0.0
        %242 = vmatprep.subr.mxu0 0.0
        %243 = vmatpush1.msra.mxu0 0.0
        %244 = vmatprep.subr.mxu0 0.0
        %245 = vmatpush1.msra.mxu0 0.0
        %246 = vmatprep.subr.mxu0 0.0
        %247 = vmatpush1.msra.mxu0 0.0
        %248 = vmatprep.subr.mxu0 0.0
        %249 = vmatpush1.msra.mxu0 0.0
        %250 = vmatprep.subr.mxu0 0.0
        %251 = vmatpush1.msra.mxu0 0.0
        %252 = vmatprep.subr.mxu0 0.0
        %253 = vmatpush1.msra.mxu0 0.0
        %254 = vmatprep.subr.mxu0 0.0
        %255 = vmatpush1.msra.mxu0 0.0
        %256 = vmatprep.subr.mxu0 0.0
        %257 = vmatpush1.msra.mxu0 0.0
        %258 = vmatprep.subr.mxu0 0.0
        %259 = vmatpush1.msra.mxu0 0.0
        %260 = vmatprep.subr.mxu0 0.0
        %261 = vmatpush1.msra.mxu0 0.0
        %262 = vmatprep.subr.mxu0 0.0
        %263 = vmatpush1.msra.mxu0 0.0
        %264 = vmatprep.subr.mxu0 0.0
        %265 = vmatpush1.msra.mxu0 0.0
        %266 = vmatprep.subr.mxu0 0.0
        %267 = vmatpush1.msra.mxu0 0.0
        %268 = vmatprep.subr.mxu0 0.0
        %269 = vmatpush1.msra.mxu0 0.0
        %270 = vmatprep.subr.mxu0 0.0
        %271 = vmatpush1.msra.mxu0 0.0
        %272 = vmatprep.subr.mxu0 0.0
        %273 = vmatpush1.msra.mxu0 0.0
        %274 = vmatprep.subr.mxu0 0.0
        %275 = vmatpush1.msra.mxu0 0.0
        %276 = vmatprep.subr.mxu0 0.0
        %277 = vmatpush1.msra.mxu0 0.0
        %278 = vmatprep.subr.mxu0 0.0
        %279 = vmatpush1.msra.mxu0 0.0
        %280 = vmatprep.subr.mxu0 0.0
        %281 = vmatpush1.msra.mxu0 0.0
        %282 = vmatprep.subr.mxu0 0.0
        %283 = vmatpush1.msra.mxu0 0.0
        %284 = vmatprep.subr.mxu0 0.0
        %285 = vmatpush1.msra.mxu0 0.0
        %286 = vmatprep.subr.mxu0 0.0
        %287 = vmatpush1.msra.mxu0 0.0
        %288 = vmatprep.mubr.f32.mxu0 0.0
        %289 = vmatmul.mubr.f32.gmra.mrb[0].mxu0 %v222
        %v290 = vpop.f32.mrb[0].mxu0
        %v291 = vadd.f32 0.0, %v290
        %v292 = vpop.f32.mrb[0].mxu0
        %293 = vdwg.mxu0
        %v294 = vlaneseq
        %v295 = vand.u32 %v294, 127
        %296 = vset.pattern.permute.xlu0 0
        %297 = vperm.xlu0 %296, %v196
        %v298 = vpop.permute.xlu0 %297
        %299 = vset.pattern.permute.xlu0 0
        %300 = vperm.xlu0 %299, %v197
        %v301 = vpop.permute.xlu0 %300
        %302 = vset.pattern.permute.xlu0 0
        %303 = vperm.xlu0 %302, %v198
        %v304 = vpop.permute.xlu0 %303
        %305 = vset.pattern.permute.xlu0 0
        %306 = vperm.xlu0 %305, %v199
        %v307 = vpop.permute.xlu0 %306
        %308 = vset.pattern.permute.xlu0 0
        %309 = vperm.xlu0 %308, %v200
        %v310 = vpop.permute.xlu0 %309
        %311 = vset.pattern.permute.xlu0 0
        %312 = vperm.xlu0 %311, %v201
        %v313 = vpop.permute.xlu0 %312
        %314 = vset.pattern.permute.xlu0 0
        %315 = vperm.xlu0 %314, %v202
        %v316 = vpop.permute.xlu0 %315
        %317 = vset.pattern.permute.xlu0 0
        %318 = vperm.xlu0 %317, %v203
        %v319 = vpop.permute.xlu0 %318
        %320 = vset.pattern.permute.xlu0 0
        %321 = vperm.xlu0 %320, %v204
        %v322 = vpop.permute.xlu0 %321
        %323 = vset.pattern.permute.xlu0 0
        %324 = vperm.xlu0 %323, %v205
        %v325 = vpop.permute.xlu0 %324
        %326 = vset.pattern.permute.xlu0 0
        %327 = vperm.xlu0 %326, %v206
        %v328 = vpop.permute.xlu0 %327
        %329 = vset.pattern.permute.xlu0 0
        %330 = vperm.xlu0 %329, %v207
        %v331 = vpop.permute.xlu0 %330
        %332 = vset.pattern.permute.xlu0 0
        %333 = vperm.xlu0 %332, %v208
        %v334 = vpop.permute.xlu0 %333
        %335 = vset.pattern.permute.xlu0 0
        %336 = vperm.xlu0 %335, %v209
        %v337 = vpop.permute.xlu0 %336
        %338 = vset.pattern.permute.xlu0 0
        %339 = vperm.xlu0 %338, %v210
        %v340 = vpop.permute.xlu0 %339
        %341 = vset.pattern.permute.xlu0 0
        %342 = vperm.xlu0 %341, %v211
        %v343 = vpop.permute.xlu0 %342
        %344 = vset.pattern.permute.xlu0 0
        %345 = vperm.xlu0 %344, %v212
        %v346 = vpop.permute.xlu0 %345
        %347 = vset.pattern.permute.xlu0 0
        %348 = vperm.xlu0 %347, %v213
        %v349 = vpop.permute.xlu0 %348
        %350 = vset.pattern.permute.xlu0 0
        %351 = vperm.xlu0 %350, %v214
        %v352 = vpop.permute.xlu0 %351
        %353 = vset.pattern.permute.xlu0 0
        %354 = vperm.xlu0 %353, %v215
        %v355 = vpop.permute.xlu0 %354
        %356 = vset.pattern.permute.xlu0 0
        %357 = vperm.xlu0 %356, %v216
        %v358 = vpop.permute.xlu0 %357
        %359 = vset.pattern.permute.xlu0 0
        %360 = vperm.xlu0 %359, %v217
        %v361 = vpop.permute.xlu0 %360
        %362 = vset.pattern.permute.xlu0 0
        %363 = vperm.xlu0 %362, %v218
        %v364 = vpop.permute.xlu0 %363
        %365 = vset.pattern.permute.xlu0 0
        %366 = vperm.xlu0 %365, %v219
        %v367 = vpop.permute.xlu0 %366
        %vm368 = vcmp.eq.s32.totalorder %v298, %v295
        %vm369 = vcmp.eq.s32.totalorder %v301, %v295
        %vm370 = vcmp.eq.s32.totalorder %v304, %v295
        %vm371 = vcmp.eq.s32.totalorder %v307, %v295
        %vm372 = vcmp.eq.s32.totalorder %v310, %v295
        %vm373 = vcmp.eq.s32.totalorder %v313, %v295
        %vm374 = vcmp.eq.s32.totalorder %v316, %v295
        %vm375 = vcmp.eq.s32.totalorder %v319, %v295
        %vm376 = vcmp.eq.s32.totalorder %v322, %v295
        %vm377 = vcmp.eq.s32.totalorder %v325, %v295
        %vm378 = vcmp.eq.s32.totalorder %v328, %v295
        %vm379 = vcmp.eq.s32.totalorder %v331, %v295
        %vm380 = vcmp.eq.s32.totalorder %v334, %v295
        %vm381 = vcmp.eq.s32.totalorder %v337, %v295
        %vm382 = vcmp.eq.s32.totalorder %v340, %v295
        %vm383 = vcmp.eq.s32.totalorder %v343, %v295
        %vm384 = vcmp.eq.s32.totalorder %v346, %v295
        %vm385 = vcmp.eq.s32.totalorder %v349, %v295
        %vm386 = vcmp.eq.s32.totalorder %v352, %v295
        %vm387 = vcmp.eq.s32.totalorder %v355, %v295
        %vm388 = vcmp.eq.s32.totalorder %v358, %v295
        %vm389 = vcmp.eq.s32.totalorder %v361, %v295
        %vm390 = vcmp.eq.s32.totalorder %v364, %v295
        %vm391 = vcmp.eq.s32.totalorder %v367, %v295
        %v392 = vsel %vm368, 1, 0
        %v393 = vsel %vm369, 1, 0
        %v394 = vsel %vm370, 1, 0
        %v395 = vsel %vm371, 1, 0
        %v396 = vsel %vm372, 1, 0
        %v397 = vsel %vm373, 1, 0
        %v398 = vsel %vm374, 1, 0
        %v399 = vsel %vm375, 1, 0
        %v400 = vsel %vm376, 1, 0
        %v401 = vsel %vm377, 1, 0
        %v402 = vsel %vm378, 1, 0
        %v403 = vsel %vm379, 1, 0
        %v404 = vsel %vm380, 1, 0
        %v405 = vsel %vm381, 1, 0
        %v406 = vsel %vm382, 1, 0
        %v407 = vsel %vm383, 1, 0
        %v408 = vsel %vm384, 1, 0
        %v409 = vsel %vm385, 1, 0
        %v410 = vsel %vm386, 1, 0
        %v411 = vsel %vm387, 1, 0
        %v412 = vsel %vm388, 1, 0
        %v413 = vsel %vm389, 1, 0
        %v414 = vsel %vm390, 1, 0
        %v415 = vsel %vm391, 1, 0
        %v416 = vcvt.s32.f32 %v392
        %v417 = vcvt.s32.f32 %v393
        %v418 = vcvt.s32.f32 %v394
        %v419 = vcvt.s32.f32 %v395
        %v420 = vcvt.s32.f32 %v396
        %v421 = vcvt.s32.f32 %v397
        %v422 = vcvt.s32.f32 %v398
        %v423 = vcvt.s32.f32 %v399
        %v424 = vcvt.s32.f32 %v400
        %v425 = vcvt.s32.f32 %v401
        %v426 = vcvt.s32.f32 %v402
        %v427 = vcvt.s32.f32 %v403
        %v428 = vcvt.s32.f32 %v404
        %v429 = vcvt.s32.f32 %v405
        %v430 = vcvt.s32.f32 %v406
        %v431 = vcvt.s32.f32 %v407
        %v432 = vcvt.s32.f32 %v408
        %v433 = vcvt.s32.f32 %v409
        %v434 = vcvt.s32.f32 %v410
        %v435 = vcvt.s32.f32 %v411
        %v436 = vcvt.s32.f32 %v412
        %v437 = vcvt.s32.f32 %v413
        %v438 = vcvt.s32.f32 %v414
        %v439 = vcvt.s32.f32 %v415
        %v441 = vcombine.high %v291, %v291
        %v443 = vunpack.c.l.s4 1966171168
        %v444 = vunpack.c.0.s8 %v443
        %v445 = vlaneseq
        %v446 = vshrl.u32 %v445, 7
        %v447 = vsub.s32 %v444, %v446
        %v448 = vrot.slane %v291, %v447
        %v450 = vunpack.c.l.s4 1966171168
        %v451 = vunpack.c.0.s8 %v450
        %v452 = vlaneseq
        %v453 = vshrl.u32 %v452, 7
        %v454 = vsub.s32 %v451, %v453
        %v455 = vrot.slane %v441, %v454
        %v456 = vcombine.high %v448, %v448
        %v457 = vcombine.high %v455, %v455
        %v459 = vunpack.c.l.s4 1966171168
        %v460 = vunpack.c.0.s8 %v459
        %v461 = vlaneseq
        %v462 = vshrl.u32 %v461, 7
        %v463 = vsub.s32 %v460, %v462
        %v464 = vrot.slane %v448, %v463
        %v466 = vunpack.c.l.s4 1966171168
        %v467 = vunpack.c.0.s8 %v466
        %v468 = vlaneseq
        %v469 = vshrl.u32 %v468, 7
        %v470 = vsub.s32 %v467, %v469
        %v471 = vrot.slane %v455, %v470
        %v473 = vunpack.c.l.s4 1966171168
        %v474 = vunpack.c.0.s8 %v473
        %v475 = vlaneseq
        %v476 = vshrl.u32 %v475, 7
        %v477 = vsub.s32 %v474, %v476
        %v478 = vrot.slane %v456, %v477
        %v480 = vunpack.c.l.s4 1966171168
        %v481 = vunpack.c.0.s8 %v480
        %v482 = vlaneseq
        %v483 = vshrl.u32 %v482, 7
        %v484 = vsub.s32 %v481, %v483
        %v485 = vrot.slane %v457, %v484
        %v486 = vcombine.high %v464, %v464
        %v487 = vcombine.high %v471, %v471
        %v488 = vcombine.high %v478, %v478
        %v489 = vcombine.high %v485, %v485
        %v490 = vlaneseq
        %v491 = vshrl.u32 %v490, 7
        %v492 = vsub.s32 0, %v491
        %v493 = vrot.slane %v464, %v492
        %v494 = vlaneseq
        %v495 = vshrl.u32 %v494, 7
        %v496 = vsub.s32 0, %v495
        %v497 = vrot.slane %v478, %v496
        %v498 = vlaneseq
        %v499 = vshrl.u32 %v498, 7
        %v500 = vsub.s32 0, %v499
        %v501 = vrot.slane %v486, %v500
        %v502 = vlaneseq
        %v503 = vshrl.u32 %v502, 7
        %v504 = vsub.s32 0, %v503
        %v505 = vrot.slane %v488, %v504
        %v506 = vlaneseq
        %v507 = vshrl.u32 %v506, 7
        %v508 = vsub.s32 0, %v507
        %v509 = vrot.slane %v471, %v508
        %v510 = vlaneseq
        %v511 = vshrl.u32 %v510, 7
        %v512 = vsub.s32 0, %v511
        %v513 = vrot.slane %v485, %v512
        %v514 = vlaneseq
        %v515 = vshrl.u32 %v514, 7
        %v516 = vsub.s32 0, %v515
        %v517 = vrot.slane %v487, %v516
        %v518 = vlaneseq
        %v519 = vshrl.u32 %v518, 7
        %v520 = vsub.s32 0, %v519
        %v521 = vrot.slane %v489, %v520
        %v530 = vmul.f32 %v416, %v493
        %v531 = vmul.f32 %v417, %v493
        %v532 = vmul.f32 %v418, %v493
        %v533 = vmul.f32 %v419, %v497
        %v534 = vmul.f32 %v420, %v497
        %v535 = vmul.f32 %v421, %v497
        %v536 = vmul.f32 %v422, %v501
        %v537 = vmul.f32 %v423, %v501
        %v538 = vmul.f32 %v424, %v501
        %v539 = vmul.f32 %v425, %v505
        %v540 = vmul.f32 %v426, %v505
        %v541 = vmul.f32 %v427, %v505
        %v542 = vmul.f32 %v428, %v509
        %v543 = vmul.f32 %v429, %v509
        %v544 = vmul.f32 %v430, %v509
        %v545 = vmul.f32 %v431, %v513
        %v546 = vmul.f32 %v432, %v513
        %v547 = vmul.f32 %v433, %v513
        %v548 = vmul.f32 %v434, %v517
        %v549 = vmul.f32 %v435, %v517
        %v550 = vmul.f32 %v436, %v517
        %v551 = vmul.f32 %v437, %v521
        %v552 = vmul.f32 %v438, %v521
        %v553 = vmul.f32 %v439, %v521
        %vm554 = vcmask 818176
        %v555 = vsel %vm554, %v530, 0.0
        %556 = vadd.xlane.f32.xlu0 %v555
        %v557 = vpop.xlane.xlu0 %556
        %v558 = vsel %vm554, %v531, 0.0
        %559 = vadd.xlane.f32.xlu0 %v558
        %v560 = vpop.xlane.xlu0 %559
        %vm561 = vcmask 812032
        %v562 = vsel %vm561, %v532, 0.0
        %563 = vadd.xlane.f32.xlu0 %v562
        %v564 = vpop.xlane.xlu0 %563
        %v565 = vsel %vm554, %v533, 0.0
        %566 = vadd.xlane.f32.xlu0 %v565
        %v567 = vpop.xlane.xlu0 %566
        %v568 = vsel %vm554, %v534, 0.0
        %569 = vadd.xlane.f32.xlu0 %v568
        %v570 = vpop.xlane.xlu0 %569
        %v571 = vsel %vm561, %v535, 0.0
        %572 = vadd.xlane.f32.xlu0 %v571
        %v573 = vpop.xlane.xlu0 %572
        %v574 = vsel %vm554, %v536, 0.0
        %575 = vadd.xlane.f32.xlu0 %v574
        %v576 = vpop.xlane.xlu0 %575
        %v577 = vsel %vm554, %v537, 0.0
        %578 = vadd.xlane.f32.xlu0 %v577
        %v579 = vpop.xlane.xlu0 %578
        %v580 = vsel %vm561, %v538, 0.0
        %581 = vadd.xlane.f32.xlu0 %v580
        %v582 = vpop.xlane.xlu0 %581
        %v583 = vsel %vm554, %v539, 0.0
        %584 = vadd.xlane.f32.xlu0 %v583
        %v585 = vpop.xlane.xlu0 %584
        %v586 = vsel %vm554, %v540, 0.0
        %587 = vadd.xlane.f32.xlu0 %v586
        %v588 = vpop.xlane.xlu0 %587
        %v589 = vsel %vm561, %v541, 0.0
        %590 = vadd.xlane.f32.xlu0 %v589
        %v591 = vpop.xlane.xlu0 %590
        %v592 = vsel %vm554, %v542, 0.0
        %593 = vadd.xlane.f32.xlu0 %v592
        %v594 = vpop.xlane.xlu0 %593
        %v595 = vsel %vm554, %v543, 0.0
        %596 = vadd.xlane.f32.xlu0 %v595
        %v597 = vpop.xlane.xlu0 %596
        %v598 = vsel %vm561, %v544, 0.0
        %599 = vadd.xlane.f32.xlu0 %v598
        %v600 = vpop.xlane.xlu0 %599
        %v601 = vsel %vm554, %v545, 0.0
        %602 = vadd.xlane.f32.xlu0 %v601
        %v603 = vpop.xlane.xlu0 %602
        %v604 = vsel %vm554, %v546, 0.0
        %605 = vadd.xlane.f32.xlu0 %v604
        %v606 = vpop.xlane.xlu0 %605
        %v607 = vsel %vm561, %v547, 0.0
        %608 = vadd.xlane.f32.xlu0 %v607
        %v609 = vpop.xlane.xlu0 %608
        %v610 = vsel %vm554, %v548, 0.0
        %611 = vadd.xlane.f32.xlu0 %v610
        %v612 = vpop.xlane.xlu0 %611
        %v613 = vsel %vm554, %v549, 0.0
        %614 = vadd.xlane.f32.xlu0 %v613
        %v615 = vpop.xlane.xlu0 %614
        %v616 = vsel %vm561, %v550, 0.0
        %617 = vadd.xlane.f32.xlu0 %v616
        %v618 = vpop.xlane.xlu0 %617
        %v619 = vsel %vm554, %v551, 0.0
        %620 = vadd.xlane.f32.xlu0 %v619
        %v621 = vpop.xlane.xlu0 %620
        %v622 = vsel %vm554, %v552, 0.0
        %623 = vadd.xlane.f32.xlu0 %v622
        %v624 = vpop.xlane.xlu0 %623
        %v625 = vsel %vm561, %v553, 0.0
        %626 = vadd.xlane.f32.xlu0 %v625
        %v627 = vpop.xlane.xlu0 %626
        %vm628 = vcmp.lt.s32.totalorder %v295, 3
        %v629 = vsub.f32 0.0, %v557
        %v630 = vsub.f32 0.0, %v560
        %v631 = vsub.f32 0.0, %v564
        %v632 = vsub.f32 0.0, %v567
        %v633 = vsub.f32 0.0, %v570
        %v634 = vsub.f32 0.0, %v573
        %v635 = vsub.f32 0.0, %v576
        %v636 = vsub.f32 0.0, %v579
        %v637 = vsub.f32 0.0, %v582
        %v638 = vsub.f32 0.0, %v585
        %v639 = vsub.f32 0.0, %v588
        %v640 = vsub.f32 0.0, %v591
        %v641 = vsub.f32 0.0, %v594
        %v642 = vsub.f32 0.0, %v597
        %v643 = vsub.f32 0.0, %v600
        %v644 = vsub.f32 0.0, %v603
        %v645 = vsub.f32 0.0, %v606
        %v646 = vsub.f32 0.0, %v609
        %v647 = vsub.f32 0.0, %v612
        %v648 = vsub.f32 0.0, %v615
        %v649 = vsub.f32 0.0, %v618
        %v650 = vsub.f32 0.0, %v621
        %v651 = vsub.f32 0.0, %v624
        %v652 = vsub.f32 0.0, %v627
        %v677 = vlaneseq
        %v678 = vshrl.u32 %v677, 7
        %v679 = vsub.s32 %v295, %v678
        %v680 = vrot.slane %v557, %v679
        %v681 = vadd.s32 %v295, 4294967288
        %v682 = vlaneseq
        %v683 = vshrl.u32 %v682, 7
        %v684 = vsub.s32 %v681, %v683
        %v685 = vrot.slane %v560, %v684
        %vm686 = vcmask 130112
        %v687 = vsel %vm686, %v685, %v680
        %v688 = vadd.s32 %v295, 4294967280
        %v689 = vlaneseq
        %v690 = vshrl.u32 %v689, 7
        %v691 = vsub.s32 %v688, %v690
        %v692 = vrot.slane %v564, %v691
        %vm693 = vcmask 195712
        %v694 = vsel %vm693, %v692, %v687
        %v695 = vlaneseq
        %v696 = vshrl.u32 %v695, 7
        %v697 = vsub.s32 %v295, %v696
        %v698 = vrot.slane %v567, %v697
        %v699 = vlaneseq
        %v700 = vshrl.u32 %v699, 7
        %v701 = vsub.s32 %v681, %v700
        %v702 = vrot.slane %v570, %v701
        %v703 = vsel %vm686, %v702, %v698
        %v704 = vlaneseq
        %v705 = vshrl.u32 %v704, 7
        %v706 = vsub.s32 %v688, %v705
        %v707 = vrot.slane %v573, %v706
        %v708 = vsel %vm693, %v707, %v703
        %v709 = vlaneseq
        %v710 = vshrl.u32 %v709, 7
        %v711 = vsub.s32 %v295, %v710
        %v712 = vrot.slane %v576, %v711
        %v713 = vlaneseq
        %v714 = vshrl.u32 %v713, 7
        %v715 = vsub.s32 %v681, %v714
        %v716 = vrot.slane %v579, %v715
        %v717 = vsel %vm686, %v716, %v712
        %v718 = vlaneseq
        %v719 = vshrl.u32 %v718, 7
        %v720 = vsub.s32 %v688, %v719
        %v721 = vrot.slane %v582, %v720
        %v722 = vsel %vm693, %v721, %v717
        %v723 = vlaneseq
        %v724 = vshrl.u32 %v723, 7
        %v725 = vsub.s32 %v295, %v724
        %v726 = vrot.slane %v585, %v725
        %v727 = vlaneseq
        %v728 = vshrl.u32 %v727, 7
        %v729 = vsub.s32 %v681, %v728
        %v730 = vrot.slane %v588, %v729
        %v731 = vsel %vm686, %v730, %v726
        %v732 = vlaneseq
        %v733 = vshrl.u32 %v732, 7
        %v734 = vsub.s32 %v688, %v733
        %v735 = vrot.slane %v591, %v734
        %v736 = vsel %vm693, %v735, %v731
        %v737 = vlaneseq
        %v738 = vshrl.u32 %v737, 7
        %v739 = vsub.s32 %v295, %v738
        %v740 = vrot.slane %v594, %v739
        %v741 = vlaneseq
        %v742 = vshrl.u32 %v741, 7
        %v743 = vsub.s32 %v681, %v742
        %v744 = vrot.slane %v597, %v743
        %v745 = vsel %vm686, %v744, %v740
        %v746 = vlaneseq
        %v747 = vshrl.u32 %v746, 7
        %v748 = vsub.s32 %v688, %v747
        %v749 = vrot.slane %v600, %v748
        %v750 = vsel %vm693, %v749, %v745
        %v751 = vlaneseq
        %v752 = vshrl.u32 %v751, 7
        %v753 = vsub.s32 %v295, %v752
        %v754 = vrot.slane %v603, %v753
        %v755 = vlaneseq
        %v756 = vshrl.u32 %v755, 7
        %v757 = vsub.s32 %v681, %v756
        %v758 = vrot.slane %v606, %v757
        %v759 = vsel %vm686, %v758, %v754
        %v760 = vlaneseq
        %v761 = vshrl.u32 %v760, 7
        %v762 = vsub.s32 %v688, %v761
        %v763 = vrot.slane %v609, %v762
        %v764 = vsel %vm693, %v763, %v759
        %v765 = vlaneseq
        %v766 = vshrl.u32 %v765, 7
        %v767 = vsub.s32 %v295, %v766
        %v768 = vrot.slane %v612, %v767
        %v769 = vlaneseq
        %v770 = vshrl.u32 %v769, 7
        %v771 = vsub.s32 %v681, %v770
        %v772 = vrot.slane %v615, %v771
        %v773 = vsel %vm686, %v772, %v768
        %v774 = vlaneseq
        %v775 = vshrl.u32 %v774, 7
        %v776 = vsub.s32 %v688, %v775
        %v777 = vrot.slane %v618, %v776
        %v778 = vsel %vm693, %v777, %v773
        %v779 = vlaneseq
        %v780 = vshrl.u32 %v779, 7
        %v781 = vsub.s32 %v295, %v780
        %v782 = vrot.slane %v621, %v781
        %v783 = vlaneseq
        %v784 = vshrl.u32 %v783, 7
        %v785 = vsub.s32 %v681, %v784
        %v786 = vrot.slane %v624, %v785
        %v787 = vsel %vm686, %v786, %v782
        %v788 = vlaneseq
        %v789 = vshrl.u32 %v788, 7
        %v790 = vsub.s32 %v688, %v789
        %v791 = vrot.slane %v627, %v790
        %v792 = vsel %vm693, %v791, %v787
        %vm793 = vcmask 1041409
        %v794 = vsel %vm793, %v708, %v694
        %vm795 = vcmask 1042434
        %v796 = vsel %vm795, %v722, %v794
        %vm797 = vcmask 1043459
        %v798 = vsel %vm797, %v736, %v796
        %vm799 = vcmask 1044484
        %v800 = vsel %vm799, %v750, %v798
        %vm801 = vcmask 1045509
        %v802 = vsel %vm801, %v764, %v800
        %vm803 = vcmask 1046534
        %v804 = vsel %vm803, %v778, %v802
        %vm805 = vcmask 1047559
        %v806 = vsel %vm805, %v792, %v804
        %v832 = vlaneseq
        %v833 = vshrl.u32 %v832, 7
        %v834 = vsub.s32 %v295, %v833
        %v835 = vrot.slane %v629, %v834
        %v836 = vlaneseq
        %v837 = vshrl.u32 %v836, 7
        %v838 = vsub.s32 %v681, %v837
        %v839 = vrot.slane %v630, %v838
        %v840 = vsel %vm686, %v839, %v835
        %v841 = vlaneseq
        %v842 = vshrl.u32 %v841, 7
        %v843 = vsub.s32 %v688, %v842
        %v844 = vrot.slane %v631, %v843
        %v845 = vsel %vm693, %v844, %v840
        %v846 = vlaneseq
        %v847 = vshrl.u32 %v846, 7
        %v848 = vsub.s32 %v295, %v847
        %v849 = vrot.slane %v632, %v848
        %v850 = vlaneseq
        %v851 = vshrl.u32 %v850, 7
        %v852 = vsub.s32 %v681, %v851
        %v853 = vrot.slane %v633, %v852
        %v854 = vsel %vm686, %v853, %v849
        %v855 = vlaneseq
        %v856 = vshrl.u32 %v855, 7
        %v857 = vsub.s32 %v688, %v856
        %v858 = vrot.slane %v634, %v857
        %v859 = vsel %vm693, %v858, %v854
        %v860 = vlaneseq
        %v861 = vshrl.u32 %v860, 7
        %v862 = vsub.s32 %v295, %v861
        %v863 = vrot.slane %v635, %v862
        %v864 = vlaneseq
        %v865 = vshrl.u32 %v864, 7
        %v866 = vsub.s32 %v681, %v865
        %v867 = vrot.slane %v636, %v866
        %v868 = vsel %vm686, %v867, %v863
        %v869 = vlaneseq
        %v870 = vshrl.u32 %v869, 7
        %v871 = vsub.s32 %v688, %v870
        %v872 = vrot.slane %v637, %v871
        %v873 = vsel %vm693, %v872, %v868
        %v874 = vlaneseq
        %v875 = vshrl.u32 %v874, 7
        %v876 = vsub.s32 %v295, %v875
        %v877 = vrot.slane %v638, %v876
        %v878 = vlaneseq
        %v879 = vshrl.u32 %v878, 7
        %v880 = vsub.s32 %v681, %v879
        %v881 = vrot.slane %v639, %v880
        %v882 = vsel %vm686, %v881, %v877
        %v883 = vlaneseq
        %v884 = vshrl.u32 %v883, 7
        %v885 = vsub.s32 %v688, %v884
        %v886 = vrot.slane %v640, %v885
        %v887 = vsel %vm693, %v886, %v882
        %v888 = vlaneseq
        %v889 = vshrl.u32 %v888, 7
        %v890 = vsub.s32 %v295, %v889
        %v891 = vrot.slane %v641, %v890
        %v892 = vlaneseq
        %v893 = vshrl.u32 %v892, 7
        %v894 = vsub.s32 %v681, %v893
        %v895 = vrot.slane %v642, %v894
        %v896 = vsel %vm686, %v895, %v891
        %v897 = vlaneseq
        %v898 = vshrl.u32 %v897, 7
        %v899 = vsub.s32 %v688, %v898
        %v900 = vrot.slane %v643, %v899
        %v901 = vsel %vm693, %v900, %v896
        %v902 = vlaneseq
        %v903 = vshrl.u32 %v902, 7
        %v904 = vsub.s32 %v295, %v903
        %v905 = vrot.slane %v644, %v904
        %v906 = vlaneseq
        %v907 = vshrl.u32 %v906, 7
        %v908 = vsub.s32 %v681, %v907
        %v909 = vrot.slane %v645, %v908
        %v910 = vsel %vm686, %v909, %v905
        %v911 = vlaneseq
        %v912 = vshrl.u32 %v911, 7
        %v913 = vsub.s32 %v688, %v912
        %v914 = vrot.slane %v646, %v913
        %v915 = vsel %vm693, %v914, %v910
        %v916 = vlaneseq
        %v917 = vshrl.u32 %v916, 7
        %v918 = vsub.s32 %v295, %v917
        %v919 = vrot.slane %v647, %v918
        %v920 = vlaneseq
        %v921 = vshrl.u32 %v920, 7
        %v922 = vsub.s32 %v681, %v921
        %v923 = vrot.slane %v648, %v922
        %v924 = vsel %vm686, %v923, %v919
        %v925 = vlaneseq
        %v926 = vshrl.u32 %v925, 7
        %v927 = vsub.s32 %v688, %v926
        %v928 = vrot.slane %v649, %v927
        %v929 = vsel %vm693, %v928, %v924
        %v930 = vlaneseq
        %v931 = vshrl.u32 %v930, 7
        %v932 = vsub.s32 %v295, %v931
        %v933 = vrot.slane %v650, %v932
        %v934 = vlaneseq
        %v935 = vshrl.u32 %v934, 7
        %v936 = vsub.s32 %v681, %v935
        %v937 = vrot.slane %v651, %v936
        %v938 = vsel %vm686, %v937, %v933
        %v939 = vlaneseq
        %v940 = vshrl.u32 %v939, 7
        %v941 = vsub.s32 %v688, %v940
        %v942 = vrot.slane %v652, %v941
        %v943 = vsel %vm693, %v942, %v938
        %v944 = vsel %vm793, %v859, %v845
        %v945 = vsel %vm795, %v873, %v944
        %v946 = vsel %vm797, %v887, %v945
        %v947 = vsel %vm799, %v901, %v946
        %v948 = vsel %vm801, %v915, %v947
        %v949 = vsel %vm803, %v929, %v948
        %v950 = vsel %vm805, %v943, %v949
        %v952 = vsel %vm628, %v806, %v950
        %v953 = vmin.f32 %v952, 0.0
        %v954 = vand.u32 2147483647, %v952
        %v955 = vsub.f32 0.0, %v954
        %v956 = vmul.f32 %v955, 1.442695
        %v957 = vpow.pop %v956
        %v958 = vadd.f32 %v957, 1.0
        %v959 = vlog2.pop %v958
        %v960 = vmul.f32 %v959, 0.6931472
        %v961 = vsub.f32 %v953, %v960
        %vm962 = vcmask 146432
        %v963 = vsel %vm962, %v961, 0.0
        %964 = vadd.xlane.f32.xlu0 %v963
        %v965 = vpop.xlane.xlu0 %964
        %v966 = vrcp.pop 3.0
        %v967 = vmul.f32 %v965, %v966
        %968 = vst [vmem:[%s179] sm:$0xff] %v967
        %s969 = sand.u32 %s98, 1
        %s970 = scalar_lea.sflag [#allocation3], %s969
        %s971 = sand.u32 %s98, 1
        %s972 = smul.addr %s971, 8
        %s973 = scalar_lea.vmem [#allocation2], %s972
        // Predicated region
        $region33: #{tpu_custom_call.1} parent=31 // pred_check
          %p974 = pneg %p108
        $region34: #{tpu_custom_call.1} parent=31 // pred_check_branch
          %976 = sbr.rel (%p974) target = $region36
        $region35: #{tpu_custom_call.1} parent=31 // pred_region
          %s978 = ssub.s32 128, 128
          %979 = vsyncadd %s970, %s978
          %s980 = smul.addr %s17, 128
          %s981 = scalar_lea.hbm %s3, %s980
          %s983 = sshll.u32 %s973, 4
          %s984 = int_to_ptr.vmem [resolvable:$true] %s983
          %986 = dma.vmem_to_hbm [thread:$0]  %s984, 128, %s981, %s970
        $region36: #{tpu_custom_call.1} parent=31 // pred_fallthru
          _
      $region32: #{tpu_custom_call.1} parent=5 // pred_fallthru
        _
      %p987 = scmp.le.s32.totalorder 2, %s12
      // Predicated region
      $region37: #{tpu_custom_call.1} parent=5 // pred_check
        %p988 = pneg %p987
      $region38: #{tpu_custom_call.1} parent=5 // pred_check_branch
        %990 = sbr.rel (%p988) target = $region40
      $region39: #{tpu_custom_call.1} parent=5 // pred_region
        %s991 = ssub.s32 %s12, 2
        // Predicated region
        $region41: #{tpu_custom_call.1} parent=39 // pred_check
          %p992 = pneg %p114
        $region42: #{tpu_custom_call.1} parent=39 // pred_check_branch
          %994 = sbr.rel (%p992) target = $region44
        $region43: #{tpu_custom_call.1} parent=39 // pred_region
          %s995 = sand.u32 %s99, 1
          %s996 = scalar_lea.sflag [#allocation3], %s995
          %s997 = sand.u32 %s99, 1
          %s998 = smul.addr %s997, 8
          %s999 = scalar_lea.vmem [#allocation2], %s998
          %1000 = dma.done %s996, 128
        $region44: #{tpu_custom_call.1} parent=39 // pred_fallthru
          _
      $region40: #{tpu_custom_call.1} parent=5 // pred_fallthru
        _
    $region6: #{tpu_custom_call.1} parent=1 // loop_footer
      %s16 = sadd.s32 1, %s12
    $region7: #{tpu_custom_call.1} parent=1 // loop_footer_branch
      %11 = sbr.rel target = $region3
    $region8: #{tpu_custom_call.1} parent=1 // loop_exit
      _
    %1001 = vsyncpa [#allocation3], 1
    %s1002 = scalar_lea.sflag [#allocation3], 1
    %1003 = vsyncpa %s1002, 1

</llo_original>
